<compile_context>
chip_gen: v5e
topology: v5e:2x2
jax: 0.10.0
libtpu: 0.0.40
codegen_flags: <defaults>
</compile_context>

<pallas_src>
import functools

import jax
import jax.numpy as jnp
import numpy as np
from jax import lax
from jax.experimental import pallas as pl
from jax.experimental.pallas import tpu as pltpu

BN_EPS = 1e-5


def make_boundary_masks(H, W):
    """(4, 1, H*W) f32 validity masks: [col dj=-1, col dj=+1, row di=-1, row di=+1]."""
    i = np.repeat(np.arange(H), W)           # row index per flattened pixel
    j = np.tile(np.arange(W), H)             # col index per flattened pixel
    cm_l = (j >= 1).astype(np.float32)       # neighbour at j-1 exists
    cm_r = (j <= W - 2).astype(np.float32)   # neighbour at j+1 exists
    rm_u = (i >= 1).astype(np.float32)       # neighbour at i-1 exists
    rm_d = (i <= H - 2).astype(np.float32)   # neighbour at i+1 exists
    return jnp.asarray(np.stack([cm_l, cm_r, rm_u, rm_d], axis=0)[:, None, :])


def d_block_kernel(x_ref, mask_ref, pww_ref, dww_ref, bias_ref, o_ref, *, H, W, B):
    """B images per grid step; activations are (C, H*W): channels on sublanes,
    pixels lane-dense (H*W is a multiple of 128)."""
    HW = H * W
    masks = mask_ref[...]            # (4, 1, HW)
    cm_l, cm_r = masks[0], masks[1]  # col validity for dj = -1 / +1   (1, HW)
    rm_u, rm_d = masks[2], masks[3]  # row validity for di = -1 / +1   (1, HW)
    pww = pww_ref[...]               # (3, Cin, Cout, 1)  [conv1, pw1, pw2]
    dww = dww_ref[...]               # (2, 9, C, 1)       [dw1, dw2] x tap x channel
    bias = bias_ref[...]             # (5, C, 1)          [conv1, dw1, pw1, dw2, pw2]
    C = pww.shape[1]

    def pw1x1(z, w, b):
        # 1x1 conv (+ folded BN) as C broadcast-FMAs on the VPU:
        # out[co, p] = sum_ci w[ci][co, 0] * z[ci, p] + b[co, 0]
        acc = w[0] * z[0:1, :]
        for ci in range(1, C):
            acc = acc + w[ci] * z[ci:ci + 1, :]
        return acc + b

    def dw3x3(z, w, b):
        # Depthwise 3x3 (+ folded BN), padding=1.  Neighbours via lane rolls of the
        # flattened image: 2 unit rolls (dj=+-1) are reused across all three rows;
        # the per-row weighted sums need only 2 more rolls by +-W (di=+-1).
        # Wrapped rows/cols are zeroed by the factorized boundary masks.
        a_m = pltpu.roll(z, 1, axis=1) * cm_l          # z[p-1], dj = -1
        a_0 = z                                        # dj = 0
        a_p = pltpu.roll(z, HW - 1, axis=1) * cm_r     # z[p+1], dj = +1

        def rowsum(r):  # r = 0,1,2  <->  di = -1, 0, +1 ; taps t = 3*r + (dj+1)
            return w[3 * r] * a_m + w[3 * r + 1] * a_0 + w[3 * r + 2] * a_p

        out = rowsum(1)                                            # di = 0
        out = out + pltpu.roll(rowsum(0), W, axis=1) * rm_u        # di = -1
        out = out + pltpu.roll(rowsum(2), HW - W, axis=1) * rm_d   # di = +1
        return out + b

    for bi in range(B):
        x = x_ref[bi]                                        # (C, HW)
        # Branch consumes x first so x dies early (shorter live range).
        t = jnp.maximum(dw3x3(x, dww[0], bias[1]), 0.0)      # dw  -> bn -> relu
        x1 = pw1x1(x, pww[0], bias[0])                       # bn1(conv1(x))
        t = jnp.maximum(pw1x1(t, pww[1], bias[2]), 0.0)      # 1x1 -> bn -> relu
        t = jnp.maximum(dw3x3(t, dww[1], bias[3]), 0.0)      # dw  -> bn -> relu
        x2 = pw1x1(t, pww[2], bias[4])                       # 1x1 (+ bn2 folded)
        o_ref[bi] = jnp.maximum(x1 + x2, 0.0).astype(o_ref.dtype)


def _images_per_step(N, max_b=8):
    """Largest divisor of N that is <= max_b while keeping the grid extent >= 2."""
    best = 1
    for b in range(1, min(N, max_b) + 1):
        if N % b == 0 and (N // b >= 2 or N == 1):
            best = b
    return best


def d_block_forward(x_nchw, kparams):
    """Pallas D_block forward.  Input/output are NCHW like the PyTorch module."""
    N, C, H, W = x_nchw.shape
    HW = H * W
    assert HW % 128 == 0, "flattened spatial axis must be lane-dense (multiple of 128)"
    pww, dww, bias = kparams

    # Small-C layout: NCHW -> (N, C, HW) is a pure reshape (no transpose, no pad).
    x = x_nchw.reshape(N, C, HW)
    masks = make_boundary_masks(H, W)

    B = _images_per_step(N)
    grid = (N // B,)

    def pinned(a):  # grid-invariant operand (weights / masks)
        return pl.BlockSpec(a.shape, lambda n, _nd=a.ndim: (0,) * _nd)

    block_bytes = B * C * HW * 4
    pinned_bytes = sum(int(a.size) * 4 for a in (masks, pww, dww, bias))
    vmem_limit = int(min(48 << 20, max(8 << 20, 32 * block_bytes + 4 * pinned_bytes)))

    out = pl.pallas_call(
        functools.partial(d_block_kernel, H=H, W=W, B=B),
        out_shape=jax.ShapeDtypeStruct((N, C, HW), jnp.float32),
        grid=grid,
        in_specs=[pl.BlockSpec((B, C, HW), lambda n: (n, 0, 0)),
                  pinned(masks), pinned(pww), pinned(dww), pinned(bias)],
        out_specs=pl.BlockSpec((B, C, HW), lambda n: (n, 0, 0)),
        compiler_params=pltpu.CompilerParams(
            dimension_semantics=("parallel",),      # images independent -> v7x 2 TCs
            vmem_limit_bytes=vmem_limit),
    )(x, masks, pww, dww, bias)

    return out.reshape(N, C, H, W)


# ----------------- parameter construction / BN folding (plain-JAX glue) -----------------

def init_params(key, C):
    keys = iter(jax.random.split(key, 64))

    def nrm(shape, scale=0.1):
        return scale * jax.random.normal(next(keys), shape, jnp.float32)

    p = {}

    def add_bn(prefix):
        p[prefix + "_g"] = 1.0 + nrm((C,))
        p[prefix + "_b"] = nrm((C,))
        p[prefix + "_m"] = nrm((C,))
        p[prefix + "_v"] = 0.5 + jax.random.uniform(next(keys), (C,), jnp.float32)

    p["conv1_w"] = nrm((C, C, 1, 1)); p["conv1_b"] = nrm((C,)); add_bn("bn1")
    p["dw1_w"] = nrm((C, 1, 3, 3));   p["dw1_b"] = nrm((C,));   add_bn("bnb1")
    p["pw1_w"] = nrm((C, C, 1, 1));   p["pw1_b"] = nrm((C,));   add_bn("bnb2")
    p["dw2_w"] = nrm((C, 1, 3, 3));   p["dw2_b"] = nrm((C,));   add_bn("bnb3")
    p["pw2_w"] = nrm((C, C, 1, 1));   p["pw2_b"] = nrm((C,));   add_bn("bn2")
    return p


def fold_for_kernel(p, C):
    """Fold eval-mode BN (general running stats) into conv weights; stack into the
    three consolidated kernel operands (pointwise, depthwise, biases)."""
    def scale_shift(prefix):
        s = p[prefix + "_g"] / jnp.sqrt(p[prefix + "_v"] + BN_EPS)
        return s, p[prefix + "_b"] - p[prefix + "_m"] * s

    def pack_pw(wname, bname, bnprefix):
        s, sh = scale_shift(bnprefix)
        w = (p[wname][:, :, 0, 0] * s[:, None]).T[:, :, None]    # (Cin, Cout, 1)
        b = (p[bname] * s + sh)[:, None]                         # (C, 1)
        return w, b

    def pack_dw(wname, bname, bnprefix):
        s, sh = scale_shift(bnprefix)
        # tap index t = 3*(di+1) + (dj+1)
        w = (p[wname][:, 0] * s[:, None, None]).reshape(C, 9).T[:, :, None]  # (9, C, 1)
        b = (p[bname] * s + sh)[:, None]                         # (C, 1)
        return w, b

    w1, b1 = pack_pw("conv1_w", "conv1_b", "bn1")
    dw1, bdw1 = pack_dw("dw1_w", "dw1_b", "bnb1")
    pw1, bpw1 = pack_pw("pw1_w", "pw1_b", "bnb2")
    dw2, bdw2 = pack_dw("dw2_w", "dw2_b", "bnb3")
    pw2, bpw2 = pack_pw("pw2_w", "pw2_b", "bn2")

    pww = jnp.stack([w1, pw1, pw2])                      # (3, Cin, Cout, 1)
    dww = jnp.stack([dw1, dw2])                          # (2, 9, C, 1)
    bias = jnp.stack([b1, bdw1, bpw1, bdw2, bpw2])       # (5, C, 1)
    return pww, dww, bias


# ---------------------------------- pure-JAX reference ----------------------------------

def reference_forward(x_nchw, p):
    def bn(z, g, b, mean, var):
        s = g / jnp.sqrt(var + BN_EPS)
        return z * s[None, :, None, None] + (b - mean * s)[None, :, None, None]

    def conv1x1(z, w, b):
        y = lax.conv_general_dilated(z, w, (1, 1), 'VALID',
                                     dimension_numbers=('NCHW', 'OIHW', 'NCHW'))
        return y + b[None, :, None, None]

    def dwconv(z, w, b):
        y = lax.conv_general_dilated(z, w, (1, 1), ((1, 1), (1, 1)),
                                     dimension_numbers=('NCHW', 'OIHW', 'NCHW'),
                                     feature_group_count=z.shape[1])
        return y + b[None, :, None, None]

    relu = lambda z: jnp.maximum(z, 0.0)

    x1 = bn(conv1x1(x_nchw, p["conv1_w"], p["conv1_b"]),
            p["bn1_g"], p["bn1_b"], p["bn1_m"], p["bn1_v"])
    t = relu(bn(dwconv(x_nchw, p["dw1_w"], p["dw1_b"]),
                p["bnb1_g"], p["bnb1_b"], p["bnb1_m"], p["bnb1_v"]))
    t = relu(bn(conv1x1(t, p["pw1_w"], p["pw1_b"]),
                p["bnb2_g"], p["bnb2_b"], p["bnb2_m"], p["bnb2_v"]))
    t = relu(bn(dwconv(t, p["dw2_w"], p["dw2_b"]),
                p["bnb3_g"], p["bnb3_b"], p["bnb3_m"], p["bnb3_v"]))
    t = conv1x1(t, p["pw2_w"], p["pw2_b"])
    x2 = bn(t, p["bn2_g"], p["bn2_b"], p["bn2_m"], p["bn2_v"])
    return relu(x1 + x2)


if __name__ == "__main__":
    key = jax.random.PRNGKey(0)
    k_p, k_x = jax.random.split(key)

    # D_block's branch feeds x straight into a depthwise conv with out_channels groups,
    # so in_channels == out_channels; the demo uses C_in = C_out = 4.
    N, C, H, W = 2, 4, 16, 16
    x = jax.random.normal(k_x, (N, C, H, W), jnp.float32)

    params = init_params(k_p, C)
    kparams = fold_for_kernel(params, C)

    out = d_block_forward(x, kparams)
    out = jax.block_until_ready(out)
    assert out.shape == (N, C, H, W)

    ref = reference_forward(x, params)
    np.testing.assert_allclose(np.asarray(out), np.asarray(ref), rtol=1e-4, atol=1e-4)

    print("KERNEL_OK")
</pallas_src>

<mosaic_0001>
module attributes {stable_mosaic.version = 11 : i64} {
  func.func @d_block_kernel(%arg0: i32, %arg1: memref<1x4x256xf32, #tpu.memory_space<vmem>>, %arg2: memref<4x1x256xf32, #tpu.memory_space<vmem>>, %arg3: memref<3x4x4x1xf32, #tpu.memory_space<vmem>>, %arg4: memref<2x9x4x1xf32, #tpu.memory_space<vmem>>, %arg5: memref<5x4x1xf32, #tpu.memory_space<vmem>>, %arg6: memref<1x4x256xf32, #tpu.memory_space<vmem>>) attributes {dimension_semantics = [#tpu.dimension_semantics<parallel>], iteration_bounds = array<i64: 2>, scalar_prefetch = 0 : i64, scratch_operands = 0 : i64, tpu.core_type = #tpu.core_type<tc>, window_params = [{transform_indices = @transform_0, window_bounds = array<i64: 1, 4, 256>}, {pipeline_mode = #tpu.pipeline_mode<synchronous>, transform_indices = @transform_1, window_bounds = array<i64: 4, 1, 256>}, {pipeline_mode = #tpu.pipeline_mode<synchronous>, transform_indices = @transform_2, window_bounds = array<i64: 3, 4, 4, 1>}, {pipeline_mode = #tpu.pipeline_mode<synchronous>, transform_indices = @transform_3, window_bounds = array<i64: 2, 9, 4, 1>}, {pipeline_mode = #tpu.pipeline_mode<synchronous>, transform_indices = @transform_4, window_bounds = array<i64: 5, 4, 1>}, {transform_indices = @transform_5, window_bounds = array<i64: 1, 4, 256>}]} {
    %c0 = arith.constant 0 : index
    %c0_0 = arith.constant 0 : index
    %c0_1 = arith.constant 0 : index
    %0 = vector.load %arg2[%c0, %c0_0, %c0_1] : memref<4x1x256xf32, #tpu.memory_space<vmem>>, vector<4x1x256xf32>
    %1 = vector.extract_strided_slice %0 {offsets = [0, 0, 0], sizes = [1, 1, 256], strides = [1, 1, 1]} : vector<4x1x256xf32> to vector<1x1x256xf32>
    %2 = vector.shape_cast %1 : vector<1x1x256xf32> to vector<1x256xf32>
    %3 = vector.extract_strided_slice %0 {offsets = [1, 0, 0], sizes = [1, 1, 256], strides = [1, 1, 1]} : vector<4x1x256xf32> to vector<1x1x256xf32>
    %4 = vector.shape_cast %3 : vector<1x1x256xf32> to vector<1x256xf32>
    %5 = vector.extract_strided_slice %0 {offsets = [2, 0, 0], sizes = [1, 1, 256], strides = [1, 1, 1]} : vector<4x1x256xf32> to vector<1x1x256xf32>
    %6 = vector.shape_cast %5 : vector<1x1x256xf32> to vector<1x256xf32>
    %7 = vector.extract_strided_slice %0 {offsets = [3, 0, 0], sizes = [1, 1, 256], strides = [1, 1, 1]} : vector<4x1x256xf32> to vector<1x1x256xf32>
    %8 = vector.shape_cast %7 : vector<1x1x256xf32> to vector<1x256xf32>
    %c0_2 = arith.constant 0 : index
    %c0_3 = arith.constant 0 : index
    %c0_4 = arith.constant 0 : index
    %c0_5 = arith.constant 0 : index
    %9 = vector.load %arg3[%c0_2, %c0_3, %c0_4, %c0_5] : memref<3x4x4x1xf32, #tpu.memory_space<vmem>>, vector<3x4x4x1xf32>
    %c0_6 = arith.constant 0 : index
    %c0_7 = arith.constant 0 : index
    %c0_8 = arith.constant 0 : index
    %c0_9 = arith.constant 0 : index
    %10 = vector.load %arg4[%c0_6, %c0_7, %c0_8, %c0_9] : memref<2x9x4x1xf32, #tpu.memory_space<vmem>>, vector<2x9x4x1xf32>
    %c0_10 = arith.constant 0 : index
    %c0_11 = arith.constant 0 : index
    %c0_12 = arith.constant 0 : index
    %11 = vector.load %arg5[%c0_10, %c0_11, %c0_12] : memref<5x4x1xf32, #tpu.memory_space<vmem>>, vector<5x4x1xf32>
    %c0_13 = arith.constant 0 : index
    %c0_14 = arith.constant 0 : index
    %c0_15 = arith.constant 0 : index
    %12 = vector.load %arg1[%c0_13, %c0_14, %c0_15] : memref<1x4x256xf32, #tpu.memory_space<vmem>>, vector<1x4x256xf32>
    %13 = vector.shape_cast %12 : vector<1x4x256xf32> to vector<4x256xf32>
    %14 = vector.extract_strided_slice %10 {offsets = [0, 0, 0, 0], sizes = [1, 9, 4, 1], strides = [1, 1, 1, 1]} : vector<2x9x4x1xf32> to vector<1x9x4x1xf32>
    %15 = vector.shape_cast %14 : vector<1x9x4x1xf32> to vector<9x4x1xf32>
    %16 = vector.extract_strided_slice %11 {offsets = [1, 0, 0], sizes = [1, 4, 1], strides = [1, 1, 1]} : vector<5x4x1xf32> to vector<1x4x1xf32>
    %17 = vector.shape_cast %16 : vector<1x4x1xf32> to vector<4x1xf32>
    %c1_i32 = arith.constant 1 : i32
    %18 = tpu.dynamic_rotate %13 by %c1_i32 dim 1 : vector<4x256xf32>, i32 -> vector<4x256xf32>
    %19 = vector.broadcast %2 : vector<1x256xf32> to vector<4x256xf32>
    %20 = arith.mulf %18, %19 : vector<4x256xf32>
    %c255_i32 = arith.constant 255 : i32
    %21 = tpu.dynamic_rotate %13 by %c255_i32 dim 1 : vector<4x256xf32>, i32 -> vector<4x256xf32>
    %22 = vector.broadcast %4 : vector<1x256xf32> to vector<4x256xf32>
    %23 = arith.mulf %21, %22 : vector<4x256xf32>
    %24 = vector.extract_strided_slice %15 {offsets = [3, 0, 0], sizes = [1, 4, 1], strides = [1, 1, 1]} : vector<9x4x1xf32> to vector<1x4x1xf32>
    %25 = vector.shape_cast %24 : vector<1x4x1xf32> to vector<4x1xf32>
    %26 = vector.broadcast %25 : vector<4x1xf32> to vector<4x256xf32>
    %27 = arith.mulf %26, %20 : vector<4x256xf32>
    %28 = vector.extract_strided_slice %15 {offsets = [4, 0, 0], sizes = [1, 4, 1], strides = [1, 1, 1]} : vector<9x4x1xf32> to vector<1x4x1xf32>
    %29 = vector.shape_cast %28 : vector<1x4x1xf32> to vector<4x1xf32>
    %30 = vector.broadcast %29 : vector<4x1xf32> to vector<4x256xf32>
    %31 = arith.mulf %30, %13 : vector<4x256xf32>
    %32 = arith.addf %27, %31 : vector<4x256xf32>
    %33 = vector.extract_strided_slice %15 {offsets = [5, 0, 0], sizes = [1, 4, 1], strides = [1, 1, 1]} : vector<9x4x1xf32> to vector<1x4x1xf32>
    %34 = vector.shape_cast %33 : vector<1x4x1xf32> to vector<4x1xf32>
    %35 = vector.broadcast %34 : vector<4x1xf32> to vector<4x256xf32>
    %36 = arith.mulf %35, %23 : vector<4x256xf32>
    %37 = arith.addf %32, %36 : vector<4x256xf32>
    %38 = vector.extract_strided_slice %15 {offsets = [0, 0, 0], sizes = [1, 4, 1], strides = [1, 1, 1]} : vector<9x4x1xf32> to vector<1x4x1xf32>
    %39 = vector.shape_cast %38 : vector<1x4x1xf32> to vector<4x1xf32>
    %40 = vector.broadcast %39 : vector<4x1xf32> to vector<4x256xf32>
    %41 = arith.mulf %40, %20 : vector<4x256xf32>
    %42 = vector.extract_strided_slice %15 {offsets = [1, 0, 0], sizes = [1, 4, 1], strides = [1, 1, 1]} : vector<9x4x1xf32> to vector<1x4x1xf32>
    %43 = vector.shape_cast %42 : vector<1x4x1xf32> to vector<4x1xf32>
    %44 = vector.broadcast %43 : vector<4x1xf32> to vector<4x256xf32>
    %45 = arith.mulf %44, %13 : vector<4x256xf32>
    %46 = arith.addf %41, %45 : vector<4x256xf32>
    %47 = vector.extract_strided_slice %15 {offsets = [2, 0, 0], sizes = [1, 4, 1], strides = [1, 1, 1]} : vector<9x4x1xf32> to vector<1x4x1xf32>
    %48 = vector.shape_cast %47 : vector<1x4x1xf32> to vector<4x1xf32>
    %49 = vector.broadcast %48 : vector<4x1xf32> to vector<4x256xf32>
    %50 = arith.mulf %49, %23 : vector<4x256xf32>
    %51 = arith.addf %46, %50 : vector<4x256xf32>
    %c16_i32 = arith.constant 16 : i32
    %52 = tpu.dynamic_rotate %51 by %c16_i32 dim 1 : vector<4x256xf32>, i32 -> vector<4x256xf32>
    %53 = vector.broadcast %6 : vector<1x256xf32> to vector<4x256xf32>
    %54 = arith.mulf %52, %53 : vector<4x256xf32>
    %55 = arith.addf %37, %54 : vector<4x256xf32>
    %56 = vector.extract_strided_slice %15 {offsets = [6, 0, 0], sizes = [1, 4, 1], strides = [1, 1, 1]} : vector<9x4x1xf32> to vector<1x4x1xf32>
    %57 = vector.shape_cast %56 : vector<1x4x1xf32> to vector<4x1xf32>
    %58 = vector.broadcast %57 : vector<4x1xf32> to vector<4x256xf32>
    %59 = arith.mulf %58, %20 : vector<4x256xf32>
    %60 = vector.extract_strided_slice %15 {offsets = [7, 0, 0], sizes = [1, 4, 1], strides = [1, 1, 1]} : vector<9x4x1xf32> to vector<1x4x1xf32>
    %61 = vector.shape_cast %60 : vector<1x4x1xf32> to vector<4x1xf32>
    %62 = vector.broadcast %61 : vector<4x1xf32> to vector<4x256xf32>
    %63 = arith.mulf %62, %13 : vector<4x256xf32>
    %64 = arith.addf %59, %63 : vector<4x256xf32>
    %65 = vector.extract_strided_slice %15 {offsets = [8, 0, 0], sizes = [1, 4, 1], strides = [1, 1, 1]} : vector<9x4x1xf32> to vector<1x4x1xf32>
    %66 = vector.shape_cast %65 : vector<1x4x1xf32> to vector<4x1xf32>
    %67 = vector.broadcast %66 : vector<4x1xf32> to vector<4x256xf32>
    %68 = arith.mulf %67, %23 : vector<4x256xf32>
    %69 = arith.addf %64, %68 : vector<4x256xf32>
    %c240_i32 = arith.constant 240 : i32
    %70 = tpu.dynamic_rotate %69 by %c240_i32 dim 1 : vector<4x256xf32>, i32 -> vector<4x256xf32>
    %71 = vector.broadcast %8 : vector<1x256xf32> to vector<4x256xf32>
    %72 = arith.mulf %70, %71 : vector<4x256xf32>
    %73 = arith.addf %55, %72 : vector<4x256xf32>
    %74 = vector.broadcast %17 : vector<4x1xf32> to vector<4x256xf32>
    %75 = arith.addf %73, %74 : vector<4x256xf32>
    %cst = arith.constant 0.000000e+00 : f32
    %76 = vector.broadcast %cst : f32 to vector<4x256xf32>
    %77 = arith.maximumf %75, %76 : vector<4x256xf32>
    %78 = vector.extract_strided_slice %9 {offsets = [0, 0, 0, 0], sizes = [1, 4, 4, 1], strides = [1, 1, 1, 1]} : vector<3x4x4x1xf32> to vector<1x4x4x1xf32>
    %79 = vector.shape_cast %78 : vector<1x4x4x1xf32> to vector<4x4x1xf32>
    %80 = vector.extract_strided_slice %11 {offsets = [0, 0, 0], sizes = [1, 4, 1], strides = [1, 1, 1]} : vector<5x4x1xf32> to vector<1x4x1xf32>
    %81 = vector.shape_cast %80 : vector<1x4x1xf32> to vector<4x1xf32>
    %82 = vector.extract_strided_slice %79 {offsets = [0, 0, 0], sizes = [1, 4, 1], strides = [1, 1, 1]} : vector<4x4x1xf32> to vector<1x4x1xf32>
    %83 = vector.shape_cast %82 : vector<1x4x1xf32> to vector<4x1xf32>
    %84 = vector.extract_strided_slice %13 {offsets = [0, 0], sizes = [1, 256], strides = [1, 1]} : vector<4x256xf32> to vector<1x256xf32>
    %85 = vector.broadcast %83 : vector<4x1xf32> to vector<4x256xf32>
    %86 = vector.broadcast %84 : vector<1x256xf32> to vector<4x256xf32>
    %87 = arith.mulf %85, %86 : vector<4x256xf32>
    %88 = vector.extract_strided_slice %79 {offsets = [1, 0, 0], sizes = [1, 4, 1], strides = [1, 1, 1]} : vector<4x4x1xf32> to vector<1x4x1xf32>
    %89 = vector.shape_cast %88 : vector<1x4x1xf32> to vector<4x1xf32>
    %90 = vector.extract_strided_slice %13 {offsets = [1, 0], sizes = [1, 256], strides = [1, 1]} : vector<4x256xf32> to vector<1x256xf32>
    %91 = vector.broadcast %89 : vector<4x1xf32> to vector<4x256xf32>
    %92 = vector.broadcast %90 : vector<1x256xf32> to vector<4x256xf32>
    %93 = arith.mulf %91, %92 : vector<4x256xf32>
    %94 = arith.addf %87, %93 : vector<4x256xf32>
    %95 = vector.extract_strided_slice %79 {offsets = [2, 0, 0], sizes = [1, 4, 1], strides = [1, 1, 1]} : vector<4x4x1xf32> to vector<1x4x1xf32>
    %96 = vector.shape_cast %95 : vector<1x4x1xf32> to vector<4x1xf32>
    %97 = vector.extract_strided_slice %13 {offsets = [2, 0], sizes = [1, 256], strides = [1, 1]} : vector<4x256xf32> to vector<1x256xf32>
    %98 = vector.broadcast %96 : vector<4x1xf32> to vector<4x256xf32>
    %99 = vector.broadcast %97 : vector<1x256xf32> to vector<4x256xf32>
    %100 = arith.mulf %98, %99 : vector<4x256xf32>
    %101 = arith.addf %94, %100 : vector<4x256xf32>
    %102 = vector.extract_strided_slice %79 {offsets = [3, 0, 0], sizes = [1, 4, 1], strides = [1, 1, 1]} : vector<4x4x1xf32> to vector<1x4x1xf32>
    %103 = vector.shape_cast %102 : vector<1x4x1xf32> to vector<4x1xf32>
    %104 = vector.extract_strided_slice %13 {offsets = [3, 0], sizes = [1, 256], strides = [1, 1]} : vector<4x256xf32> to vector<1x256xf32>
    %105 = vector.broadcast %103 : vector<4x1xf32> to vector<4x256xf32>
    %106 = vector.broadcast %104 : vector<1x256xf32> to vector<4x256xf32>
    %107 = arith.mulf %105, %106 : vector<4x256xf32>
    %108 = arith.addf %101, %107 : vector<4x256xf32>
    %109 = vector.broadcast %81 : vector<4x1xf32> to vector<4x256xf32>
    %110 = arith.addf %108, %109 : vector<4x256xf32>
    %111 = vector.extract_strided_slice %9 {offsets = [1, 0, 0, 0], sizes = [1, 4, 4, 1], strides = [1, 1, 1, 1]} : vector<3x4x4x1xf32> to vector<1x4x4x1xf32>
    %112 = vector.shape_cast %111 : vector<1x4x4x1xf32> to vector<4x4x1xf32>
    %113 = vector.extract_strided_slice %11 {offsets = [2, 0, 0], sizes = [1, 4, 1], strides = [1, 1, 1]} : vector<5x4x1xf32> to vector<1x4x1xf32>
    %114 = vector.shape_cast %113 : vector<1x4x1xf32> to vector<4x1xf32>
    %115 = vector.extract_strided_slice %112 {offsets = [0, 0, 0], sizes = [1, 4, 1], strides = [1, 1, 1]} : vector<4x4x1xf32> to vector<1x4x1xf32>
    %116 = vector.shape_cast %115 : vector<1x4x1xf32> to vector<4x1xf32>
    %117 = vector.extract_strided_slice %77 {offsets = [0, 0], sizes = [1, 256], strides = [1, 1]} : vector<4x256xf32> to vector<1x256xf32>
    %118 = vector.broadcast %116 : vector<4x1xf32> to vector<4x256xf32>
    %119 = vector.broadcast %117 : vector<1x256xf32> to vector<4x256xf32>
    %120 = arith.mulf %118, %119 : vector<4x256xf32>
    %121 = vector.extract_strided_slice %112 {offsets = [1, 0, 0], sizes = [1, 4, 1], strides = [1, 1, 1]} : vector<4x4x1xf32> to vector<1x4x1xf32>
    %122 = vector.shape_cast %121 : vector<1x4x1xf32> to vector<4x1xf32>
    %123 = vector.extract_strided_slice %77 {offsets = [1, 0], sizes = [1, 256], strides = [1, 1]} : vector<4x256xf32> to vector<1x256xf32>
    %124 = vector.broadcast %122 : vector<4x1xf32> to vector<4x256xf32>
    %125 = vector.broadcast %123 : vector<1x256xf32> to vector<4x256xf32>
    %126 = arith.mulf %124, %125 : vector<4x256xf32>
    %127 = arith.addf %120, %126 : vector<4x256xf32>
    %128 = vector.extract_strided_slice %112 {offsets = [2, 0, 0], sizes = [1, 4, 1], strides = [1, 1, 1]} : vector<4x4x1xf32> to vector<1x4x1xf32>
    %129 = vector.shape_cast %128 : vector<1x4x1xf32> to vector<4x1xf32>
    %130 = vector.extract_strided_slice %77 {offsets = [2, 0], sizes = [1, 256], strides = [1, 1]} : vector<4x256xf32> to vector<1x256xf32>
    %131 = vector.broadcast %129 : vector<4x1xf32> to vector<4x256xf32>
    %132 = vector.broadcast %130 : vector<1x256xf32> to vector<4x256xf32>
    %133 = arith.mulf %131, %132 : vector<4x256xf32>
    %134 = arith.addf %127, %133 : vector<4x256xf32>
    %135 = vector.extract_strided_slice %112 {offsets = [3, 0, 0], sizes = [1, 4, 1], strides = [1, 1, 1]} : vector<4x4x1xf32> to vector<1x4x1xf32>
    %136 = vector.shape_cast %135 : vector<1x4x1xf32> to vector<4x1xf32>
    %137 = vector.extract_strided_slice %77 {offsets = [3, 0], sizes = [1, 256], strides = [1, 1]} : vector<4x256xf32> to vector<1x256xf32>
    %138 = vector.broadcast %136 : vector<4x1xf32> to vector<4x256xf32>
    %139 = vector.broadcast %137 : vector<1x256xf32> to vector<4x256xf32>
    %140 = arith.mulf %138, %139 : vector<4x256xf32>
    %141 = arith.addf %134, %140 : vector<4x256xf32>
    %142 = vector.broadcast %114 : vector<4x1xf32> to vector<4x256xf32>
    %143 = arith.addf %141, %142 : vector<4x256xf32>
    %cst_16 = arith.constant 0.000000e+00 : f32
    %144 = vector.broadcast %cst_16 : f32 to vector<4x256xf32>
    %145 = arith.maximumf %143, %144 : vector<4x256xf32>
    %146 = vector.extract_strided_slice %10 {offsets = [1, 0, 0, 0], sizes = [1, 9, 4, 1], strides = [1, 1, 1, 1]} : vector<2x9x4x1xf32> to vector<1x9x4x1xf32>
    %147 = vector.shape_cast %146 : vector<1x9x4x1xf32> to vector<9x4x1xf32>
    %148 = vector.extract_strided_slice %11 {offsets = [3, 0, 0], sizes = [1, 4, 1], strides = [1, 1, 1]} : vector<5x4x1xf32> to vector<1x4x1xf32>
    %149 = vector.shape_cast %148 : vector<1x4x1xf32> to vector<4x1xf32>
    %c1_i32_17 = arith.constant 1 : i32
    %150 = tpu.dynamic_rotate %145 by %c1_i32_17 dim 1 : vector<4x256xf32>, i32 -> vector<4x256xf32>
    %151 = vector.broadcast %2 : vector<1x256xf32> to vector<4x256xf32>
    %152 = arith.mulf %150, %151 : vector<4x256xf32>
    %c255_i32_18 = arith.constant 255 : i32
    %153 = tpu.dynamic_rotate %145 by %c255_i32_18 dim 1 : vector<4x256xf32>, i32 -> vector<4x256xf32>
    %154 = vector.broadcast %4 : vector<1x256xf32> to vector<4x256xf32>
    %155 = arith.mulf %153, %154 : vector<4x256xf32>
    %156 = vector.extract_strided_slice %147 {offsets = [3, 0, 0], sizes = [1, 4, 1], strides = [1, 1, 1]} : vector<9x4x1xf32> to vector<1x4x1xf32>
    %157 = vector.shape_cast %156 : vector<1x4x1xf32> to vector<4x1xf32>
    %158 = vector.broadcast %157 : vector<4x1xf32> to vector<4x256xf32>
    %159 = arith.mulf %158, %152 : vector<4x256xf32>
    %160 = vector.extract_strided_slice %147 {offsets = [4, 0, 0], sizes = [1, 4, 1], strides = [1, 1, 1]} : vector<9x4x1xf32> to vector<1x4x1xf32>
    %161 = vector.shape_cast %160 : vector<1x4x1xf32> to vector<4x1xf32>
    %162 = vector.broadcast %161 : vector<4x1xf32> to vector<4x256xf32>
    %163 = arith.mulf %162, %145 : vector<4x256xf32>
    %164 = arith.addf %159, %163 : vector<4x256xf32>
    %165 = vector.extract_strided_slice %147 {offsets = [5, 0, 0], sizes = [1, 4, 1], strides = [1, 1, 1]} : vector<9x4x1xf32> to vector<1x4x1xf32>
    %166 = vector.shape_cast %165 : vector<1x4x1xf32> to vector<4x1xf32>
    %167 = vector.broadcast %166 : vector<4x1xf32> to vector<4x256xf32>
    %168 = arith.mulf %167, %155 : vector<4x256xf32>
    %169 = arith.addf %164, %168 : vector<4x256xf32>
    %170 = vector.extract_strided_slice %147 {offsets = [0, 0, 0], sizes = [1, 4, 1], strides = [1, 1, 1]} : vector<9x4x1xf32> to vector<1x4x1xf32>
    %171 = vector.shape_cast %170 : vector<1x4x1xf32> to vector<4x1xf32>
    %172 = vector.broadcast %171 : vector<4x1xf32> to vector<4x256xf32>
    %173 = arith.mulf %172, %152 : vector<4x256xf32>
    %174 = vector.extract_strided_slice %147 {offsets = [1, 0, 0], sizes = [1, 4, 1], strides = [1, 1, 1]} : vector<9x4x1xf32> to vector<1x4x1xf32>
    %175 = vector.shape_cast %174 : vector<1x4x1xf32> to vector<4x1xf32>
    %176 = vector.broadcast %175 : vector<4x1xf32> to vector<4x256xf32>
    %177 = arith.mulf %176, %145 : vector<4x256xf32>
    %178 = arith.addf %173, %177 : vector<4x256xf32>
    %179 = vector.extract_strided_slice %147 {offsets = [2, 0, 0], sizes = [1, 4, 1], strides = [1, 1, 1]} : vector<9x4x1xf32> to vector<1x4x1xf32>
    %180 = vector.shape_cast %179 : vector<1x4x1xf32> to vector<4x1xf32>
    %181 = vector.broadcast %180 : vector<4x1xf32> to vector<4x256xf32>
    %182 = arith.mulf %181, %155 : vector<4x256xf32>
    %183 = arith.addf %178, %182 : vector<4x256xf32>
    %c16_i32_19 = arith.constant 16 : i32
    %184 = tpu.dynamic_rotate %183 by %c16_i32_19 dim 1 : vector<4x256xf32>, i32 -> vector<4x256xf32>
    %185 = vector.broadcast %6 : vector<1x256xf32> to vector<4x256xf32>
    %186 = arith.mulf %184, %185 : vector<4x256xf32>
    %187 = arith.addf %169, %186 : vector<4x256xf32>
    %188 = vector.extract_strided_slice %147 {offsets = [6, 0, 0], sizes = [1, 4, 1], strides = [1, 1, 1]} : vector<9x4x1xf32> to vector<1x4x1xf32>
    %189 = vector.shape_cast %188 : vector<1x4x1xf32> to vector<4x1xf32>
    %190 = vector.broadcast %189 : vector<4x1xf32> to vector<4x256xf32>
    %191 = arith.mulf %190, %152 : vector<4x256xf32>
    %192 = vector.extract_strided_slice %147 {offsets = [7, 0, 0], sizes = [1, 4, 1], strides = [1, 1, 1]} : vector<9x4x1xf32> to vector<1x4x1xf32>
    %193 = vector.shape_cast %192 : vector<1x4x1xf32> to vector<4x1xf32>
    %194 = vector.broadcast %193 : vector<4x1xf32> to vector<4x256xf32>
    %195 = arith.mulf %194, %145 : vector<4x256xf32>
    %196 = arith.addf %191, %195 : vector<4x256xf32>
    %197 = vector.extract_strided_slice %147 {offsets = [8, 0, 0], sizes = [1, 4, 1], strides = [1, 1, 1]} : vector<9x4x1xf32> to vector<1x4x1xf32>
    %198 = vector.shape_cast %197 : vector<1x4x1xf32> to vector<4x1xf32>
    %199 = vector.broadcast %198 : vector<4x1xf32> to vector<4x256xf32>
    %200 = arith.mulf %199, %155 : vector<4x256xf32>
    %201 = arith.addf %196, %200 : vector<4x256xf32>
    %c240_i32_20 = arith.constant 240 : i32
    %202 = tpu.dynamic_rotate %201 by %c240_i32_20 dim 1 : vector<4x256xf32>, i32 -> vector<4x256xf32>
    %203 = vector.broadcast %8 : vector<1x256xf32> to vector<4x256xf32>
    %204 = arith.mulf %202, %203 : vector<4x256xf32>
    %205 = arith.addf %187, %204 : vector<4x256xf32>
    %206 = vector.broadcast %149 : vector<4x1xf32> to vector<4x256xf32>
    %207 = arith.addf %205, %206 : vector<4x256xf32>
    %cst_21 = arith.constant 0.000000e+00 : f32
    %208 = vector.broadcast %cst_21 : f32 to vector<4x256xf32>
    %209 = arith.maximumf %207, %208 : vector<4x256xf32>
    %210 = vector.extract_strided_slice %9 {offsets = [2, 0, 0, 0], sizes = [1, 4, 4, 1], strides = [1, 1, 1, 1]} : vector<3x4x4x1xf32> to vector<1x4x4x1xf32>
    %211 = vector.shape_cast %210 : vector<1x4x4x1xf32> to vector<4x4x1xf32>
    %212 = vector.extract_strided_slice %11 {offsets = [4, 0, 0], sizes = [1, 4, 1], strides = [1, 1, 1]} : vector<5x4x1xf32> to vector<1x4x1xf32>
    %213 = vector.shape_cast %212 : vector<1x4x1xf32> to vector<4x1xf32>
    %214 = vector.extract_strided_slice %211 {offsets = [0, 0, 0], sizes = [1, 4, 1], strides = [1, 1, 1]} : vector<4x4x1xf32> to vector<1x4x1xf32>
    %215 = vector.shape_cast %214 : vector<1x4x1xf32> to vector<4x1xf32>
    %216 = vector.extract_strided_slice %209 {offsets = [0, 0], sizes = [1, 256], strides = [1, 1]} : vector<4x256xf32> to vector<1x256xf32>
    %217 = vector.broadcast %215 : vector<4x1xf32> to vector<4x256xf32>
    %218 = vector.broadcast %216 : vector<1x256xf32> to vector<4x256xf32>
    %219 = arith.mulf %217, %218 : vector<4x256xf32>
    %220 = vector.extract_strided_slice %211 {offsets = [1, 0, 0], sizes = [1, 4, 1], strides = [1, 1, 1]} : vector<4x4x1xf32> to vector<1x4x1xf32>
    %221 = vector.shape_cast %220 : vector<1x4x1xf32> to vector<4x1xf32>
    %222 = vector.extract_strided_slice %209 {offsets = [1, 0], sizes = [1, 256], strides = [1, 1]} : vector<4x256xf32> to vector<1x256xf32>
    %223 = vector.broadcast %221 : vector<4x1xf32> to vector<4x256xf32>
    %224 = vector.broadcast %222 : vector<1x256xf32> to vector<4x256xf32>
    %225 = arith.mulf %223, %224 : vector<4x256xf32>
    %226 = arith.addf %219, %225 : vector<4x256xf32>
    %227 = vector.extract_strided_slice %211 {offsets = [2, 0, 0], sizes = [1, 4, 1], strides = [1, 1, 1]} : vector<4x4x1xf32> to vector<1x4x1xf32>
    %228 = vector.shape_cast %227 : vector<1x4x1xf32> to vector<4x1xf32>
    %229 = vector.extract_strided_slice %209 {offsets = [2, 0], sizes = [1, 256], strides = [1, 1]} : vector<4x256xf32> to vector<1x256xf32>
    %230 = vector.broadcast %228 : vector<4x1xf32> to vector<4x256xf32>
    %231 = vector.broadcast %229 : vector<1x256xf32> to vector<4x256xf32>
    %232 = arith.mulf %230, %231 : vector<4x256xf32>
    %233 = arith.addf %226, %232 : vector<4x256xf32>
    %234 = vector.extract_strided_slice %211 {offsets = [3, 0, 0], sizes = [1, 4, 1], strides = [1, 1, 1]} : vector<4x4x1xf32> to vector<1x4x1xf32>
    %235 = vector.shape_cast %234 : vector<1x4x1xf32> to vector<4x1xf32>
    %236 = vector.extract_strided_slice %209 {offsets = [3, 0], sizes = [1, 256], strides = [1, 1]} : vector<4x256xf32> to vector<1x256xf32>
    %237 = vector.broadcast %235 : vector<4x1xf32> to vector<4x256xf32>
    %238 = vector.broadcast %236 : vector<1x256xf32> to vector<4x256xf32>
    %239 = arith.mulf %237, %238 : vector<4x256xf32>
    %240 = arith.addf %233, %239 : vector<4x256xf32>
    %241 = vector.broadcast %213 : vector<4x1xf32> to vector<4x256xf32>
    %242 = arith.addf %240, %241 : vector<4x256xf32>
    %243 = arith.addf %110, %242 : vector<4x256xf32>
    %cst_22 = arith.constant 0.000000e+00 : f32
    %244 = vector.broadcast %cst_22 : f32 to vector<4x256xf32>
    %245 = arith.maximumf %243, %244 : vector<4x256xf32>
    %c0_23 = arith.constant 0 : index
    %c0_24 = arith.constant 0 : index
    %c0_25 = arith.constant 0 : index
    %246 = vector.load %arg6[%c0_23, %c0_24, %c0_25] : memref<1x4x256xf32, #tpu.memory_space<vmem>>, vector<1x4x256xf32>
    %247 = vector.shape_cast %246 : vector<1x4x256xf32> to vector<4x256xf32>
    %248 = vector.shape_cast %245 : vector<4x256xf32> to vector<1x4x256xf32>
    tpu.vector_store %arg6[%c0_23, %c0_24, %c0_25], %248 {strides = array<i32>} : memref<1x4x256xf32, #tpu.memory_space<vmem>>, vector<1x4x256xf32>,
    return
  }
  func.func @transform_0(%arg0: i32) -> (i32, i32, i32) {
    %c0_i32 = arith.constant 0 : i32
    %c0_i32_0 = arith.constant 0 : i32
    %c0_i32_1 = arith.constant 0 : i32
    return %arg0, %c0_i32, %c0_i32_0 : i32, i32, i32
  }
  func.func @transform_1(%arg0: i32) -> (i32, i32, i32) {
    %c0_i32 = arith.constant 0 : i32
    %c0_i32_0 = arith.constant 0 : i32
    %c0_i32_1 = arith.constant 0 : i32
    %c0_i32_2 = arith.constant 0 : i32
    return %c0_i32, %c0_i32_0, %c0_i32_1 : i32, i32, i32
  }
  func.func @transform_2(%arg0: i32) -> (i32, i32, i32, i32) {
    %c0_i32 = arith.constant 0 : i32
    %c0_i32_0 = arith.constant 0 : i32
    %c0_i32_1 = arith.constant 0 : i32
    %c0_i32_2 = arith.constant 0 : i32
    %c0_i32_3 = arith.constant 0 : i32
    return %c0_i32, %c0_i32_0, %c0_i32_1, %c0_i32_2 : i32, i32, i32, i32
  }
  func.func @transform_3(%arg0: i32) -> (i32, i32, i32, i32) {
    %c0_i32 = arith.constant 0 : i32
    %c0_i32_0 = arith.constant 0 : i32
    %c0_i32_1 = arith.constant 0 : i32
    %c0_i32_2 = arith.constant 0 : i32
    %c0_i32_3 = arith.constant 0 : i32
    return %c0_i32, %c0_i32_0, %c0_i32_1, %c0_i32_2 : i32, i32, i32, i32
  }
  func.func @transform_4(%arg0: i32) -> (i32, i32, i32) {
    %c0_i32 = arith.constant 0 : i32
    %c0_i32_0 = arith.constant 0 : i32
    %c0_i32_1 = arith.constant 0 : i32
    %c0_i32_2 = arith.constant 0 : i32
    return %c0_i32, %c0_i32_0, %c0_i32_1 : i32, i32, i32
  }
  func.func @transform_5(%arg0: i32) -> (i32, i32, i32) {
    %c0_i32 = arith.constant 0 : i32
    %c0_i32_0 = arith.constant 0 : i32
    %c0_i32_1 = arith.constant 0 : i32
    return %arg0, %c0_i32, %c0_i32_0 : i32, i32, i32
  }
}

</mosaic_0001>

<llo_original>
// kernel: tpu_custom_call.1
$region0: #{tpu_custom_call.1}
  #allocation0 [shape = 'u32[]', space=smem, size = 0x4, offset = 0x4, fixed_abs, tag = 'smem constant byte address 0x4 - core index']
  #allocation1 [shape = 'u32[72,128]{1,0:T(1,128)}', space=vmem, size = 0x9000, scoped, tag = 'internal scratch']
  %s0 = inlined_call_operand.vmem [shape: f32[2,4,256], index: 0, kind: input, shape index: {}]
  %s1 = inlined_call_operand.vmem [shape: f32[4,1,256], index: 1, kind: input, shape index: {}]
  %s2 = inlined_call_operand.vmem [shape: f32[3,4,4,1], index: 2, kind: input, shape index: {}]
  %s3 = inlined_call_operand.vmem [shape: f32[2,9,4,1], index: 3, kind: input, shape index: {}]
  %s4 = inlined_call_operand.vmem [shape: f32[5,4,1], index: 4, kind: input, shape index: {}]
  %s5 = inlined_call_operand.hbm [shape: f32[2,4,256], index: 5, kind: output, shape index: {}]
  %s6 = sld [smem:[#allocation0]]
  $region53: #{tpu_custom_call.1} parent=0
    _
  %s8 = ssub.s32 1, %s6
  %s9 = scalar_select 0, %s8, %s6
  $region1: #{tpu_custom_call.1} parent=0
    #allocation2 [shape = 'u8[8192]{0}', space=vmem, size = 0x2000, scoped, tag = 'output window, operand 0']
    #allocation3 [shape = 's32[2]{0}', space=sflag, size = 0x8, scoped, tag = 'scoped memory for tpu_custom_call.1']
    %10 = vsyncpa [#allocation3], 0
    %s11 = scalar_lea.sflag [#allocation3], 1
    %12 = vsyncpa %s11, 0
    loop: start=0, step=1, limit=4
    $region2: #{tpu_custom_call.1} parent=1 // loop_pre_header
      _
    $region3: #{tpu_custom_call.1} parent=1 // loop_header
      %s14 = sphi 0, %s18
      %p15 = scmp.ge.s32.totalorder %s14, 4
      %s24 = sphi 0, %s26
      %s27 = sphi 0, %s24
      %s28 = sphi 0, %s27
      %s44 = sphi 0, %s28
      %s48 = sphi 0, %s48
      %s50 = sphi 0, %s48
      %s51 = sphi 0, %s50
      %s65 = sphi 0, %s51
      %s69 = sphi 0, %s69
      %s71 = sphi 0, %s69
      %s72 = sphi 0, %s71
      %s86 = sphi 0, %s72
      %s90 = sphi 0, %s90
      %s92 = sphi 0, %s90
      %s93 = sphi 0, %s92
      %s107 = sphi 0, %s93
      %s111 = sphi 0, %s111
      %s113 = sphi 0, %s111
      %s114 = sphi 0, %s113
      %s128 = sphi 0, %s114
      %s134 = sphi 0, %s136
      %s137 = sphi 0, %s134
      %s138 = sphi 0, %s137
      %s154 = sphi 0, %s138
    $region4: #{tpu_custom_call.1} parent=1 // loop_header_branch
      %17 = sbr.rel (%p15) target = $region8
    $region5: #{tpu_custom_call.1} parent=1 // loop_body
      %s19 = ssub.s32 %s14, 1
      %s20 = ssub.s32 %s14, 2
      %s21 = sadd.s32 %s14, 1
      %s22 = ssub.s32 %s14, %s21
      %p23 = scmp.eq.s32.totalorder %s22, 0
      %s25 = sadd.s32 %s24, 1
      %s26 = scalar_select %p23, %s24, %s25
      %p29 = pneg %p23
      %p30 = scmp.eq.s32.totalorder %s14, 1
      %p31 = por %p29, %p30
      %p32 = scmp.ne.s32.totalorder %s24, %s27
      %p33 = scmp.eq.s32.totalorder %s14, 0
      %p34 = por %p32, %p33
      %p35 = scmp.ne.s32.totalorder %s24, %s27
      %p36 = scmp.eq.s32.totalorder %s19, 1
      %p37 = por %p35, %p36
      %p38 = scmp.ne.s32.totalorder %s27, %s28
      %p39 = scmp.eq.s32.totalorder %s19, 0
      %p40 = por %p38, %p39
      %p41 = scmp.ne.s32.totalorder %s27, %s28
      %p42 = scmp.eq.s32.totalorder %s20, 1
      %p43 = por %p41, %p42
      %p45 = scmp.ne.s32.totalorder %s28, %s44
      %p46 = scmp.eq.s32.totalorder %s20, 0
      %p47 = por %p45, %p46
      %s49 = sadd.s32 %s48, 1
      %p52 = scmp.eq.s32.totalorder %s14, 1
      %p53 = scmp.ne.s32.totalorder %s48, %s50
      %p54 = scmp.eq.s32.totalorder %s14, 0
      %p55 = por %p53, %p54
      %p56 = scmp.ne.s32.totalorder %s48, %s50
      %p57 = scmp.eq.s32.totalorder %s19, 1
      %p58 = por %p56, %p57
      %p59 = scmp.ne.s32.totalorder %s50, %s51
      %p60 = scmp.eq.s32.totalorder %s19, 0
      %p61 = por %p59, %p60
      %p62 = scmp.ne.s32.totalorder %s50, %s51
      %p63 = scmp.eq.s32.totalorder %s20, 1
      %p64 = por %p62, %p63
      %p66 = scmp.ne.s32.totalorder %s51, %s65
      %p67 = scmp.eq.s32.totalorder %s20, 0
      %p68 = por %p66, %p67
      %s70 = sadd.s32 %s69, 1
      %p73 = scmp.eq.s32.totalorder %s14, 1
      %p74 = scmp.ne.s32.totalorder %s69, %s71
      %p75 = scmp.eq.s32.totalorder %s14, 0
      %p76 = por %p74, %p75
      %p77 = scmp.ne.s32.totalorder %s69, %s71
      %p78 = scmp.eq.s32.totalorder %s19, 1
      %p79 = por %p77, %p78
      %p80 = scmp.ne.s32.totalorder %s71, %s72
      %p81 = scmp.eq.s32.totalorder %s19, 0
      %p82 = por %p80, %p81
      %p83 = scmp.ne.s32.totalorder %s71, %s72
      %p84 = scmp.eq.s32.totalorder %s20, 1
      %p85 = por %p83, %p84
      %p87 = scmp.ne.s32.totalorder %s72, %s86
      %p88 = scmp.eq.s32.totalorder %s20, 0
      %p89 = por %p87, %p88
      %s91 = sadd.s32 %s90, 1
      %p94 = scmp.eq.s32.totalorder %s14, 1
      %p95 = scmp.ne.s32.totalorder %s90, %s92
      %p96 = scmp.eq.s32.totalorder %s14, 0
      %p97 = por %p95, %p96
      %p98 = scmp.ne.s32.totalorder %s90, %s92
      %p99 = scmp.eq.s32.totalorder %s19, 1
      %p100 = por %p98, %p99
      %p101 = scmp.ne.s32.totalorder %s92, %s93
      %p102 = scmp.eq.s32.totalorder %s19, 0
      %p103 = por %p101, %p102
      %p104 = scmp.ne.s32.totalorder %s92, %s93
      %p105 = scmp.eq.s32.totalorder %s20, 1
      %p106 = por %p104, %p105
      %p108 = scmp.ne.s32.totalorder %s93, %s107
      %p109 = scmp.eq.s32.totalorder %s20, 0
      %p110 = por %p108, %p109
      %s112 = sadd.s32 %s111, 1
      %p115 = scmp.eq.s32.totalorder %s14, 1
      %p116 = scmp.ne.s32.totalorder %s111, %s113
      %p117 = scmp.eq.s32.totalorder %s14, 0
      %p118 = por %p116, %p117
      %p119 = scmp.ne.s32.totalorder %s111, %s113
      %p120 = scmp.eq.s32.totalorder %s19, 1
      %p121 = por %p119, %p120
      %p122 = scmp.ne.s32.totalorder %s113, %s114
      %p123 = scmp.eq.s32.totalorder %s19, 0
      %p124 = por %p122, %p123
      %p125 = scmp.ne.s32.totalorder %s113, %s114
      %p126 = scmp.eq.s32.totalorder %s20, 1
      %p127 = por %p125, %p126
      %p129 = scmp.ne.s32.totalorder %s114, %s128
      %p130 = scmp.eq.s32.totalorder %s20, 0
      %p131 = por %p129, %p130
      %s132 = ssub.s32 %s14, %s21
      %p133 = scmp.eq.s32.totalorder %s132, 0
      %s135 = sadd.s32 %s134, 1
      %s136 = scalar_select %p133, %s134, %s135
      %p139 = pneg %p133
      %p140 = scmp.eq.s32.totalorder %s14, 1
      %p141 = por %p139, %p140
      %p142 = scmp.ne.s32.totalorder %s134, %s137
      %p143 = scmp.eq.s32.totalorder %s14, 0
      %p144 = por %p142, %p143
      %p145 = scmp.ne.s32.totalorder %s134, %s137
      %p146 = scmp.eq.s32.totalorder %s19, 1
      %p147 = por %p145, %p146
      %p148 = scmp.ne.s32.totalorder %s137, %s138
      %p149 = scmp.eq.s32.totalorder %s19, 0
      %p150 = por %p148, %p149
      %p151 = scmp.ne.s32.totalorder %s137, %s138
      %p152 = scmp.eq.s32.totalorder %s20, 1
      %p153 = por %p151, %p152
      %p155 = scmp.ne.s32.totalorder %s138, %s154
      %p156 = scmp.eq.s32.totalorder %s20, 0
      %p157 = por %p155, %p156
      %p158 = scmp.le.s32.totalorder 1, %s14
      %p159 = scmp.lt.s32.totalorder %s14, 3
      %p160 = pnand %p158, %p159
      %p161 = pneg %p160
      // Predicated region
      $region9: #{tpu_custom_call.1} parent=5 // pred_check
        _
      $region10: #{tpu_custom_call.1} parent=5 // pred_check_branch
        %163 = sbr.rel (%p160) target = $region12
      $region11: #{tpu_custom_call.1} parent=5 // pred_region
        %s164 = ssub.s32 %s14, 1
        // Predicated region
        $region13: #{tpu_custom_call.1} parent=11 // pred_check
          %p165 = pneg %p61
        $region14: #{tpu_custom_call.1} parent=11 // pred_check_branch
          %167 = sbr.rel (%p165) target = $region16
        $region15: #{tpu_custom_call.1} parent=11 // pred_region
          _
        $region16: #{tpu_custom_call.1} parent=11 // pred_fallthru
          _
        // Predicated region
        $region17: #{tpu_custom_call.1} parent=11 // pred_check
          %p168 = pneg %p82
        $region18: #{tpu_custom_call.1} parent=11 // pred_check_branch
          %170 = sbr.rel (%p168) target = $region20
        $region19: #{tpu_custom_call.1} parent=11 // pred_region
          _
        $region20: #{tpu_custom_call.1} parent=11 // pred_fallthru
          _
        // Predicated region
        $region21: #{tpu_custom_call.1} parent=11 // pred_check
          %p171 = pneg %p103
        $region22: #{tpu_custom_call.1} parent=11 // pred_check_branch
          %173 = sbr.rel (%p171) target = $region24
        $region23: #{tpu_custom_call.1} parent=11 // pred_region
          _
        $region24: #{tpu_custom_call.1} parent=11 // pred_fallthru
          _
        // Predicated region
        $region25: #{tpu_custom_call.1} parent=11 // pred_check
          %p174 = pneg %p124
        $region26: #{tpu_custom_call.1} parent=11 // pred_check_branch
          %176 = sbr.rel (%p174) target = $region28
        $region27: #{tpu_custom_call.1} parent=11 // pred_region
          _
        $region28: #{tpu_custom_call.1} parent=11 // pred_fallthru
          _
      $region12: #{tpu_custom_call.1} parent=5 // pred_fallthru
        _
      %p177 = scmp.lt.s32.totalorder %s14, 2
      // Predicated region
      $region29: #{tpu_custom_call.1} parent=5 // pred_check
        %p178 = pneg %p177
      $region30: #{tpu_custom_call.1} parent=5 // pred_check_branch
        %180 = sbr.rel (%p178) target = $region32
      $region31: #{tpu_custom_call.1} parent=5 // pred_region
        // Predicated region
        $region33: #{tpu_custom_call.1} parent=31 // pred_check
          %p181 = pneg %p34
        $region34: #{tpu_custom_call.1} parent=31 // pred_check_branch
          %183 = sbr.rel (%p181) target = $region36
        $region35: #{tpu_custom_call.1} parent=31 // pred_region
          %p184 = scmp.lt.s32.totalorder %s14, 1
          %s185 = scalar_select %p184, %s14, 1
          %s186 = smul.addr %s185, 2
          %s187 = smul.addr %s186, 4
          %s188 = scalar_lea.vmem %s0, %s187
        $region36: #{tpu_custom_call.1} parent=31 // pred_fallthru
          _
      $region32: #{tpu_custom_call.1} parent=5 // pred_fallthru
        _
      %p189 = scmp.le.s32.totalorder 1, %s14
      %p190 = scmp.lt.s32.totalorder %s14, 3
      %p191 = pnand %p189, %p190
      %p192 = pneg %p191
      // Predicated region
      $region37: #{tpu_custom_call.1} parent=5 // pred_check
        _
      $region38: #{tpu_custom_call.1} parent=5 // pred_check_branch
        %194 = sbr.rel (%p191) target = $region40
      $region39: #{tpu_custom_call.1} parent=5 // pred_region
        %s195 = ssub.s32 %s14, 1
        %p196 = scmp.lt.s32.totalorder %s19, 1
        %s197 = scalar_select %p196, %s19, 1
        %s198 = smul.addr %s197, 2
        %s199 = smul.addr %s198, 4
        %s200 = scalar_lea.vmem %s0, %s199
        %p201 = pneg %p40
        %p202 = pneg %p37
        %p203 = pneg %p61
        %p204 = pneg %p58
        %p205 = pneg %p82
        %p206 = pneg %p79
        %p207 = pneg %p103
        %p208 = pneg %p100
        %p209 = pneg %p124
        %p210 = pneg %p121
        %p211 = pneg %p150
        %p212 = pneg %p147
        %s213 = sand.u32 %s137, 1
        %s214 = scalar_lea.sflag [#allocation3], %s213
        %s215 = sand.u32 %s137, 1
        %s216 = smul.addr %s215, 8
        %s217 = scalar_lea.vmem [#allocation2], %s216
        %p218 = scmp.lt.s32.totalorder %s19, 1
        %s219 = scalar_select %p218, %s19, 1
        %s220 = smul.addr %s219, 2
        %s221 = smul.addr %s220, 4
        %s222 = scalar_lea.vmem %s0, %s221
        %v223 = vld [vmem:[%s1] sm:$0x3]
        %v224 = vld [vmem:[%s1 + $0x2] sm:$0x3]
        %v225 = vld [vmem:[%s1 + $0x4] sm:$0x3]
        %v226 = vld [vmem:[%s1 + $0x6] sm:$0x3]
        %v227 = vld [vmem:[%s2] sm:$0xf]
        %v228 = vld [vmem:[%s2 + $0x4] sm:$0xf]
        %v229 = vld [vmem:[%s2 + $0x8] sm:$0xf]
        %v230 = vld [vmem:[%s2 + $0xc] sm:$0xf]
        %v231 = vld [vmem:[%s2 + $0x10] sm:$0xf]
        %v232 = vld [vmem:[%s2 + $0x14] sm:$0xf]
        %v233 = vld [vmem:[%s2 + $0x18] sm:$0xf]
        %v234 = vld [vmem:[%s2 + $0x1c] sm:$0xf]
        %v235 = vld [vmem:[%s2 + $0x20] sm:$0xf]
        %v236 = vld [vmem:[%s2 + $0x24] sm:$0xf]
        %v237 = vld [vmem:[%s2 + $0x28] sm:$0xf]
        %v238 = vld [vmem:[%s2 + $0x2c] sm:$0xf]
        %v239 = vld [vmem:[%s3] sm:$0xf]
        %v240 = vld [vmem:[%s3 + $0x4] sm:$0xf]
        %v241 = vld [vmem:[%s3 + $0x8] sm:$0xf]
        %v242 = vld [vmem:[%s3 + $0xc] sm:$0xf]
        %v243 = vld [vmem:[%s3 + $0x10] sm:$0xf]
        %v244 = vld [vmem:[%s3 + $0x14] sm:$0xf]
        %v245 = vld [vmem:[%s3 + $0x18] sm:$0xf]
        %v246 = vld [vmem:[%s3 + $0x1c] sm:$0xf]
        %v247 = vld [vmem:[%s3 + $0x20] sm:$0xf]
        %v248 = vld [vmem:[%s3 + $0x24] sm:$0xf]
        %v249 = vld [vmem:[%s3 + $0x28] sm:$0xf]
        %v250 = vld [vmem:[%s3 + $0x2c] sm:$0xf]
        %v251 = vld [vmem:[%s3 + $0x30] sm:$0xf]
        %v252 = vld [vmem:[%s3 + $0x34] sm:$0xf]
        %v253 = vld [vmem:[%s3 + $0x38] sm:$0xf]
        %v254 = vld [vmem:[%s3 + $0x3c] sm:$0xf]
        %v255 = vld [vmem:[%s3 + $0x40] sm:$0xf]
        %v256 = vld [vmem:[%s3 + $0x44] sm:$0xf]
        %v257 = vld [vmem:[%s4] sm:$0xf]
        %v258 = vld [vmem:[%s4 + $0x4] sm:$0xf]
        %v259 = vld [vmem:[%s4 + $0x8] sm:$0xf]
        %v260 = vld [vmem:[%s4 + $0xc] sm:$0xf]
        %v261 = vld [vmem:[%s4 + $0x10] sm:$0xf]
        %v262 = vld [vmem:[%s222] sm:$0xff]
        %264 = vst [vmem:[#allocation1] ss:$2 sm:$0xff] %v262
        %v265 = vld.sshfl [vmem:[#allocation1] sm:$0xff pattern:$0x75316420]
        %v266 = vld.sshfl [vmem:[#allocation1 + $0x8] sm:$0xff pattern:$0x75316420]
        %269 = vrot.lane.b32.xlu0 %v265, 1
        %v270 = vpop.permute.xlu0 %269
        %271 = vrot.lane.b32.xlu0 %v266, 1
        %v272 = vpop.permute.xlu0 %271
        %v273 = vlaneseq
        %v274 = vand.u32 %v273, 127
        %vm275 = vcmp.lt.s32.totalorder %v274, 1
        %v276 = vsel %vm275, %v270, %v272
        %v277 = vsel %vm275, %v272, %v270
        %v279 = vperm.slane %v223, 0
        %v280 = vperm.slane %v223, 1
        %v283 = vmul.f32 %v277, %v279
        %v284 = vmul.f32 %v276, %v280
        %285 = vst [vmem:[#allocation1] ss:$2 sm:$0xff] %v262
        %v286 = vld.sshfl [vmem:[#allocation1] sm:$0xff pattern:$0x75316420]
        %v287 = vld.sshfl [vmem:[#allocation1 + $0x8] sm:$0xff pattern:$0x75316420]
        %290 = vrot.lane.b32.xlu0 %v286, 127
        %v291 = vpop.permute.xlu0 %290
        %292 = vrot.lane.b32.xlu0 %v287, 127
        %v293 = vpop.permute.xlu0 %292
        %vm294 = vcmp.lt.s32.totalorder %v274, 127
        %v295 = vsel %vm294, %v291, %v293
        %v296 = vsel %vm294, %v293, %v291
        %v298 = vperm.slane %v224, 0
        %v299 = vperm.slane %v224, 1
        %v302 = vmul.f32 %v295, %v298
        %v303 = vmul.f32 %v296, %v299
        %305 = vset.pattern.permute.xlu0 0
        %306 = vperm.xlu0 %305, %v242
        %v307 = vpop.permute.xlu0 %306
        %v309 = vmul.f32 %v307, %v283
        %v310 = vmul.f32 %v307, %v284
        %312 = vset.pattern.permute.xlu0 0
        %313 = vperm.xlu0 %312, %v243
        %v314 = vpop.permute.xlu0 %313
        %316 = vst [vmem:[#allocation1] ss:$2 sm:$0xff] %v262
        %v317 = vld.sshfl [vmem:[#allocation1] sm:$0xff pattern:$0x75316420]
        %v318 = vld.sshfl [vmem:[#allocation1 + $0x8] sm:$0xff pattern:$0x75316420]
        %v321 = vmul.f32 %v314, %v317
        %v322 = vmul.f32 %v314, %v318
        %v323 = vadd.f32 %v309, %v321
        %v324 = vadd.f32 %v310, %v322
        %326 = vset.pattern.permute.xlu0 0
        %327 = vperm.xlu0 %326, %v244
        %v328 = vpop.permute.xlu0 %327
        %v330 = vmul.f32 %v328, %v302
        %v331 = vmul.f32 %v328, %v303
        %v332 = vadd.f32 %v323, %v330
        %v333 = vadd.f32 %v324, %v331
        %335 = vset.pattern.permute.xlu0 0
        %336 = vperm.xlu0 %335, %v239
        %v337 = vpop.permute.xlu0 %336
        %v339 = vmul.f32 %v337, %v283
        %v340 = vmul.f32 %v337, %v284
        %342 = vset.pattern.permute.xlu0 0
        %343 = vperm.xlu0 %342, %v240
        %v344 = vpop.permute.xlu0 %343
        %346 = vst [vmem:[#allocation1] ss:$2 sm:$0xff] %v262
        %v347 = vld.sshfl [vmem:[#allocation1] sm:$0xff pattern:$0x75316420]
        %v348 = vld.sshfl [vmem:[#allocation1 + $0x8] sm:$0xff pattern:$0x75316420]
        %v351 = vmul.f32 %v344, %v347
        %v352 = vmul.f32 %v344, %v348
        %v353 = vadd.f32 %v339, %v351
        %v354 = vadd.f32 %v340, %v352
        %356 = vset.pattern.permute.xlu0 0
        %357 = vperm.xlu0 %356, %v241
        %v358 = vpop.permute.xlu0 %357
        %v360 = vmul.f32 %v358, %v302
        %v361 = vmul.f32 %v358, %v303
        %v362 = vadd.f32 %v353, %v360
        %v363 = vadd.f32 %v354, %v361
        %364 = vrot.lane.b32.xlu0 %v362, 16
        %v365 = vpop.permute.xlu0 %364
        %366 = vrot.lane.b32.xlu0 %v363, 16
        %v367 = vpop.permute.xlu0 %366
        %vm368 = vcmp.lt.s32.totalorder %v274, 16
        %v369 = vsel %vm368, %v365, %v367
        %v370 = vsel %vm368, %v367, %v365
        %v372 = vperm.slane %v225, 0
        %v373 = vperm.slane %v225, 1
        %v376 = vmul.f32 %v370, %v372
        %v377 = vmul.f32 %v369, %v373
        %v378 = vadd.f32 %v332, %v376
        %v379 = vadd.f32 %v333, %v377
        %381 = vset.pattern.permute.xlu0 0
        %382 = vperm.xlu0 %381, %v245
        %v383 = vpop.permute.xlu0 %382
        %v385 = vmul.f32 %v383, %v283
        %v386 = vmul.f32 %v383, %v284
        %388 = vset.pattern.permute.xlu0 0
        %389 = vperm.xlu0 %388, %v246
        %v390 = vpop.permute.xlu0 %389
        %392 = vst [vmem:[#allocation1] ss:$2 sm:$0xff] %v262
        %v393 = vld.sshfl [vmem:[#allocation1] sm:$0xff pattern:$0x75316420]
        %v394 = vld.sshfl [vmem:[#allocation1 + $0x8] sm:$0xff pattern:$0x75316420]
        %v397 = vmul.f32 %v390, %v393
        %v398 = vmul.f32 %v390, %v394
        %v399 = vadd.f32 %v385, %v397
        %v400 = vadd.f32 %v386, %v398
        %402 = vset.pattern.permute.xlu0 0
        %403 = vperm.xlu0 %402, %v247
        %v404 = vpop.permute.xlu0 %403
        %v406 = vmul.f32 %v404, %v302
        %v407 = vmul.f32 %v404, %v303
        %v408 = vadd.f32 %v399, %v406
        %v409 = vadd.f32 %v400, %v407
        %410 = vrot.lane.b32.xlu0 %v408, 112
        %v411 = vpop.permute.xlu0 %410
        %412 = vrot.lane.b32.xlu0 %v409, 112
        %v413 = vpop.permute.xlu0 %412
        %vm414 = vcmp.lt.s32.totalorder %v274, 112
        %v415 = vsel %vm414, %v411, %v413
        %v416 = vsel %vm414, %v413, %v411
        %v418 = vperm.slane %v226, 0
        %v419 = vperm.slane %v226, 1
        %v422 = vmul.f32 %v415, %v418
        %v423 = vmul.f32 %v416, %v419
        %v424 = vadd.f32 %v378, %v422
        %v425 = vadd.f32 %v379, %v423
        %427 = vset.pattern.permute.xlu0 0
        %428 = vperm.xlu0 %427, %v258
        %v429 = vpop.permute.xlu0 %428
        %v431 = vadd.f32 %v424, %v429
        %v432 = vadd.f32 %v425, %v429
        %v433 = vmax.f32 %v431, 0.0
        %v434 = vmax.f32 %v432, 0.0
        %436 = vset.pattern.permute.xlu0 0
        %437 = vperm.xlu0 %436, %v227
        %v438 = vpop.permute.xlu0 %437
        %v440 = vperm.slane %v262, 0
        %v441 = vperm.slane %v262, 4
        %v444 = vperm.slane %v440, 0
        %v445 = vperm.slane %v441, 0
        %v446 = vmul.f32 %v438, %v444
        %v447 = vmul.f32 %v438, %v445
        %449 = vset.pattern.permute.xlu0 0
        %450 = vperm.xlu0 %449, %v228
        %v451 = vpop.permute.xlu0 %450
        %v453 = vperm.slane %v262, 1
        %v454 = vperm.slane %v262, 5
        %v457 = vperm.slane %v453, 1
        %v458 = vperm.slane %v454, 1
        %v459 = vmul.f32 %v451, %v457
        %v460 = vmul.f32 %v451, %v458
        %v461 = vadd.f32 %v446, %v459
        %v462 = vadd.f32 %v447, %v460
        %464 = vset.pattern.permute.xlu0 0
        %465 = vperm.xlu0 %464, %v229
        %v466 = vpop.permute.xlu0 %465
        %v468 = vperm.slane %v262, 2
        %v469 = vperm.slane %v262, 6
        %v472 = vperm.slane %v468, 2
        %v473 = vperm.slane %v469, 2
        %v474 = vmul.f32 %v466, %v472
        %v475 = vmul.f32 %v466, %v473
        %v476 = vadd.f32 %v461, %v474
        %v477 = vadd.f32 %v462, %v475
        %479 = vset.pattern.permute.xlu0 0
        %480 = vperm.xlu0 %479, %v230
        %v481 = vpop.permute.xlu0 %480
        %v483 = vperm.slane %v262, 3
        %v484 = vperm.slane %v262, 7
        %v487 = vperm.slane %v483, 3
        %v488 = vperm.slane %v484, 3
        %v489 = vmul.f32 %v481, %v487
        %v490 = vmul.f32 %v481, %v488
        %v491 = vadd.f32 %v476, %v489
        %v492 = vadd.f32 %v477, %v490
        %494 = vset.pattern.permute.xlu0 0
        %495 = vperm.xlu0 %494, %v257
        %v496 = vpop.permute.xlu0 %495
        %v498 = vadd.f32 %v491, %v496
        %v499 = vadd.f32 %v492, %v496
        %501 = vset.pattern.permute.xlu0 0
        %502 = vperm.xlu0 %501, %v231
        %v503 = vpop.permute.xlu0 %502
        %v505 = vperm.slane %v433, 0
        %v506 = vperm.slane %v434, 0
        %v507 = vmul.f32 %v503, %v505
        %v508 = vmul.f32 %v503, %v506
        %510 = vset.pattern.permute.xlu0 0
        %511 = vperm.xlu0 %510, %v232
        %v512 = vpop.permute.xlu0 %511
        %v514 = vperm.slane %v433, 1
        %v515 = vperm.slane %v434, 1
        %v516 = vmul.f32 %v512, %v514
        %v517 = vmul.f32 %v512, %v515
        %v518 = vadd.f32 %v507, %v516
        %v519 = vadd.f32 %v508, %v517
        %521 = vset.pattern.permute.xlu0 0
        %522 = vperm.xlu0 %521, %v233
        %v523 = vpop.permute.xlu0 %522
        %v525 = vperm.slane %v433, 2
        %v526 = vperm.slane %v434, 2
        %v527 = vmul.f32 %v523, %v525
        %v528 = vmul.f32 %v523, %v526
        %v529 = vadd.f32 %v518, %v527
        %v530 = vadd.f32 %v519, %v528
        %532 = vset.pattern.permute.xlu0 0
        %533 = vperm.xlu0 %532, %v234
        %v534 = vpop.permute.xlu0 %533
        %v536 = vperm.slane %v433, 3
        %v537 = vperm.slane %v434, 3
        %v538 = vmul.f32 %v534, %v536
        %v539 = vmul.f32 %v534, %v537
        %v540 = vadd.f32 %v529, %v538
        %v541 = vadd.f32 %v530, %v539
        %543 = vset.pattern.permute.xlu0 0
        %544 = vperm.xlu0 %543, %v259
        %v545 = vpop.permute.xlu0 %544
        %v547 = vadd.f32 %v540, %v545
        %v548 = vadd.f32 %v541, %v545
        %v549 = vmax.f32 %v547, 0.0
        %v550 = vmax.f32 %v548, 0.0
        %551 = vrot.lane.b32.xlu0 %v549, 1
        %v552 = vpop.permute.xlu0 %551
        %553 = vrot.lane.b32.xlu0 %v550, 1
        %v554 = vpop.permute.xlu0 %553
        %v555 = vsel %vm275, %v552, %v554
        %v556 = vsel %vm275, %v554, %v552
        %v557 = vmul.f32 %v556, %v279
        %v558 = vmul.f32 %v555, %v280
        %559 = vrot.lane.b32.xlu0 %v549, 127
        %v560 = vpop.permute.xlu0 %559
        %561 = vrot.lane.b32.xlu0 %v550, 127
        %v562 = vpop.permute.xlu0 %561
        %v563 = vsel %vm294, %v560, %v562
        %v564 = vsel %vm294, %v562, %v560
        %v565 = vmul.f32 %v563, %v298
        %v566 = vmul.f32 %v564, %v299
        %568 = vset.pattern.permute.xlu0 0
        %569 = vperm.xlu0 %568, %v251
        %v570 = vpop.permute.xlu0 %569
        %v572 = vmul.f32 %v570, %v557
        %v573 = vmul.f32 %v570, %v558
        %575 = vset.pattern.permute.xlu0 0
        %576 = vperm.xlu0 %575, %v252
        %v577 = vpop.permute.xlu0 %576
        %v579 = vmul.f32 %v577, %v549
        %v580 = vmul.f32 %v577, %v550
        %v581 = vadd.f32 %v572, %v579
        %v582 = vadd.f32 %v573, %v580
        %584 = vset.pattern.permute.xlu0 0
        %585 = vperm.xlu0 %584, %v253
        %v586 = vpop.permute.xlu0 %585
        %v588 = vmul.f32 %v586, %v565
        %v589 = vmul.f32 %v586, %v566
        %v590 = vadd.f32 %v581, %v588
        %v591 = vadd.f32 %v582, %v589
        %593 = vset.pattern.permute.xlu0 0
        %594 = vperm.xlu0 %593, %v248
        %v595 = vpop.permute.xlu0 %594
        %v597 = vmul.f32 %v595, %v557
        %v598 = vmul.f32 %v595, %v558
        %600 = vset.pattern.permute.xlu0 0
        %601 = vperm.xlu0 %600, %v249
        %v602 = vpop.permute.xlu0 %601
        %v604 = vmul.f32 %v602, %v549
        %v605 = vmul.f32 %v602, %v550
        %v606 = vadd.f32 %v597, %v604
        %v607 = vadd.f32 %v598, %v605
        %609 = vset.pattern.permute.xlu0 0
        %610 = vperm.xlu0 %609, %v250
        %v611 = vpop.permute.xlu0 %610
        %v613 = vmul.f32 %v611, %v565
        %v614 = vmul.f32 %v611, %v566
        %v615 = vadd.f32 %v606, %v613
        %v616 = vadd.f32 %v607, %v614
        %617 = vrot.lane.b32.xlu0 %v615, 16
        %v618 = vpop.permute.xlu0 %617
        %619 = vrot.lane.b32.xlu0 %v616, 16
        %v620 = vpop.permute.xlu0 %619
        %v621 = vsel %vm368, %v618, %v620
        %v622 = vsel %vm368, %v620, %v618
        %v623 = vmul.f32 %v622, %v372
        %v624 = vmul.f32 %v621, %v373
        %v625 = vadd.f32 %v590, %v623
        %v626 = vadd.f32 %v591, %v624
        %628 = vset.pattern.permute.xlu0 0
        %629 = vperm.xlu0 %628, %v254
        %v630 = vpop.permute.xlu0 %629
        %v632 = vmul.f32 %v630, %v557
        %v633 = vmul.f32 %v630, %v558
        %635 = vset.pattern.permute.xlu0 0
        %636 = vperm.xlu0 %635, %v255
        %v637 = vpop.permute.xlu0 %636
        %v639 = vmul.f32 %v637, %v549
        %v640 = vmul.f32 %v637, %v550
        %v641 = vadd.f32 %v632, %v639
        %v642 = vadd.f32 %v633, %v640
        %644 = vset.pattern.permute.xlu0 0
        %645 = vperm.xlu0 %644, %v256
        %v646 = vpop.permute.xlu0 %645
        %v648 = vmul.f32 %v646, %v565
        %v649 = vmul.f32 %v646, %v566
        %v650 = vadd.f32 %v641, %v648
        %v651 = vadd.f32 %v642, %v649
        %652 = vrot.lane.b32.xlu0 %v650, 112
        %v653 = vpop.permute.xlu0 %652
        %654 = vrot.lane.b32.xlu0 %v651, 112
        %v655 = vpop.permute.xlu0 %654
        %v656 = vsel %vm414, %v653, %v655
        %v657 = vsel %vm414, %v655, %v653
        %v658 = vmul.f32 %v656, %v418
        %v659 = vmul.f32 %v657, %v419
        %v660 = vadd.f32 %v625, %v658
        %v661 = vadd.f32 %v626, %v659
        %663 = vset.pattern.permute.xlu0 0
        %664 = vperm.xlu0 %663, %v260
        %v665 = vpop.permute.xlu0 %664
        %v667 = vadd.f32 %v660, %v665
        %v668 = vadd.f32 %v661, %v665
        %v669 = vmax.f32 %v667, 0.0
        %v670 = vmax.f32 %v668, 0.0
        %672 = vset.pattern.permute.xlu0 0
        %673 = vperm.xlu0 %672, %v235
        %v674 = vpop.permute.xlu0 %673
        %v676 = vperm.slane %v669, 0
        %v677 = vperm.slane %v670, 0
        %v678 = vmul.f32 %v674, %v676
        %v679 = vmul.f32 %v674, %v677
        %681 = vset.pattern.permute.xlu0 0
        %682 = vperm.xlu0 %681, %v236
        %v683 = vpop.permute.xlu0 %682
        %v685 = vperm.slane %v669, 1
        %v686 = vperm.slane %v670, 1
        %v687 = vmul.f32 %v683, %v685
        %v688 = vmul.f32 %v683, %v686
        %v689 = vadd.f32 %v678, %v687
        %v690 = vadd.f32 %v679, %v688
        %692 = vset.pattern.permute.xlu0 0
        %693 = vperm.xlu0 %692, %v237
        %v694 = vpop.permute.xlu0 %693
        %v696 = vperm.slane %v669, 2
        %v697 = vperm.slane %v670, 2
        %v698 = vmul.f32 %v694, %v696
        %v699 = vmul.f32 %v694, %v697
        %v700 = vadd.f32 %v689, %v698
        %v701 = vadd.f32 %v690, %v699
        %703 = vset.pattern.permute.xlu0 0
        %704 = vperm.xlu0 %703, %v238
        %v705 = vpop.permute.xlu0 %704
        %v707 = vperm.slane %v669, 3
        %v708 = vperm.slane %v670, 3
        %v709 = vmul.f32 %v705, %v707
        %v710 = vmul.f32 %v705, %v708
        %v711 = vadd.f32 %v700, %v709
        %v712 = vadd.f32 %v701, %v710
        %714 = vset.pattern.permute.xlu0 0
        %715 = vperm.xlu0 %714, %v261
        %v716 = vpop.permute.xlu0 %715
        %v718 = vadd.f32 %v711, %v716
        %v719 = vadd.f32 %v712, %v716
        %v720 = vadd.f32 %v498, %v718
        %v721 = vadd.f32 %v499, %v719
        %v722 = vmax.f32 %v720, 0.0
        %v723 = vmax.f32 %v721, 0.0
        %v726 = vrot.slane %v723, 4
        %vm727 = vcmask 1043456
        %v728 = vsel %vm727, %v722, %v726
        %730 = vst [vmem:[%s217] sm:$0xff] %v728
        %s731 = sand.u32 %s137, 1
        %s732 = scalar_lea.sflag [#allocation3], %s731
        %s733 = sand.u32 %s137, 1
        %s734 = smul.addr %s733, 8
        %s735 = scalar_lea.vmem [#allocation2], %s734
        // Predicated region
        $region41: #{tpu_custom_call.1} parent=39 // pred_check
          %p736 = pneg %p147
        $region42: #{tpu_custom_call.1} parent=39 // pred_check_branch
          %738 = sbr.rel (%p736) target = $region44
        $region43: #{tpu_custom_call.1} parent=39 // pred_region
          %740 = vsyncadd %s732, 0
          %s741 = smul.addr %s19, 2
          %s742 = smul.addr %s741, 4
          %s743 = scalar_lea.hbm %s5, %s742
          %s745 = sshll.u32 %s735, 4
          %s746 = int_to_ptr.vmem [resolvable:$true] %s745
          %s747 = sshll.u32 %s743, 4
          %s748 = int_to_ptr.hbm [resolvable:$true] %s747
          %750 = dma.vmem_to_hbm [thread:$0]  %s746, 128, %s748, %s732
        $region44: #{tpu_custom_call.1} parent=39 // pred_fallthru
          _
      $region40: #{tpu_custom_call.1} parent=5 // pred_fallthru
        _
      %p751 = scmp.le.s32.totalorder 2, %s14
      // Predicated region
      $region45: #{tpu_custom_call.1} parent=5 // pred_check
        %p752 = pneg %p751
      $region46: #{tpu_custom_call.1} parent=5 // pred_check_branch
        %754 = sbr.rel (%p752) target = $region48
      $region47: #{tpu_custom_call.1} parent=5 // pred_region
        %s755 = ssub.s32 %s14, 2
        // Predicated region
        $region49: #{tpu_custom_call.1} parent=47 // pred_check
          %p756 = pneg %p153
        $region50: #{tpu_custom_call.1} parent=47 // pred_check_branch
          %758 = sbr.rel (%p756) target = $region52
        $region51: #{tpu_custom_call.1} parent=47 // pred_region
          %s759 = sand.u32 %s138, 1
          %s760 = scalar_lea.sflag [#allocation3], %s759
          %s761 = sand.u32 %s138, 1
          %s762 = smul.addr %s761, 8
          %s763 = scalar_lea.vmem [#allocation2], %s762
          %765 = dma.done %s760, 128
        $region52: #{tpu_custom_call.1} parent=47 // pred_fallthru
          _
      $region48: #{tpu_custom_call.1} parent=5 // pred_fallthru
        _
    $region6: #{tpu_custom_call.1} parent=1 // loop_footer
      %s18 = sadd.s32 1, %s14
    $region7: #{tpu_custom_call.1} parent=1 // loop_footer_branch
      %13 = sbr.rel target = $region3
    $region8: #{tpu_custom_call.1} parent=1 // loop_exit
      _
    %766 = vsyncpa [#allocation3], 1
    %s767 = scalar_lea.sflag [#allocation3], 1
    %768 = vsyncpa %s767, 1

</llo_original>
